<compile_context>
chip_gen: v7x
topology: tpu7x:2x2x1
jax: 0.10.0
libtpu: 0.0.40
codegen_flags: <defaults>
</compile_context>

<pallas_src>
import functools

import jax
import jax.numpy as jnp
from jax.experimental import pallas as pl
from jax.experimental.pallas import tpu as pltpu


def _round_up(a, b):
    return (a + b - 1) // b * b


# ---------------------------------------------------------------------------
# Stage 1: per-(b, c) spatial max + mean, lane-dense over H*W, single HBM pass.
# Grid = (row blocks [parallel], H*W chunks [arbitrary, usually 1]).
# The output blocks are resident across the chunk axis -> accumulate in place.
# ---------------------------------------------------------------------------
def _pool_kernel(x_ref, max_ref, avg_ref, *, hw, hw_blk):
    k = pl.program_id(1)

    @pl.when(k == 0)
    def _init():
        max_ref[...] = jnp.full_like(max_ref, -jnp.inf)
        avg_ref[...] = jnp.zeros_like(avg_ref)

    x = x_ref[...].astype(jnp.float32)            # (row_blk, hw_blk)
    if hw % hw_blk != 0:
        # Only reachable on the chunked (huge-H*W) path: mask the ragged tail.
        col = jax.lax.broadcasted_iota(jnp.int32, x.shape, 1) + k * hw_blk
        valid = col < hw
        x_max = jnp.where(valid, x, -jnp.inf)
        x_sum = jnp.where(valid, x, 0.0)
    else:
        x_max = x
        x_sum = x

    max_ref[...] = jnp.maximum(max_ref[...], jnp.max(x_max, axis=-1, keepdims=True))
    avg_ref[...] = avg_ref[...] + jnp.sum(x_sum, axis=-1, keepdims=True)

    @pl.when(k == pl.num_programs(1) - 1)
    def _finalize():
        avg_ref[...] = avg_ref[...] * (1.0 / hw)


# ---------------------------------------------------------------------------
# Stage 2: shared MLP (1x1 convs == matmuls) on stacked [max; avg] + sigmoid.
# ---------------------------------------------------------------------------
def _mlp_kernel(xs_ref, w1_ref, w2_ref, o_ref, *, bp):
    h = jnp.maximum(
        jnp.dot(xs_ref[...], w1_ref[...], preferred_element_type=jnp.float32), 0.0)
    y = jnp.dot(h, w2_ref[...], preferred_element_type=jnp.float32)
    o_ref[...] = jax.nn.sigmoid(y[:bp, :] + y[bp:, :])


@jax.jit
def lcam(x, w1, w2):
    """LCAM forward. x: (B,C,H,W); w1: (C_,C,1,1); w2: (C,C_,1,1).
    Returns the channel attention map, shape (B, C, 1, 1), dtype of x."""
    B, C, H, W = x.shape
    C_ = w1.shape[0]
    HW = H * W
    R = B * C
    itemsize = jnp.dtype(x.dtype).itemsize

    # ---- Stage 1: pooling (no host-side pad; x read from HBM exactly once) --
    x2 = x.reshape(R, HW)

    TILE_FULL = 8 * 1024 * 1024    # block target when a full spatial row fits
    TILE_CHUNK = 4 * 1024 * 1024   # smaller when lane-chunking (mask temps)

    row_bytes = HW * itemsize
    if 8 * row_bytes <= TILE_FULL:
        hw_blk = HW                                   # full dim: no lane mask
        rows_fit = max(8, (TILE_FULL // row_bytes) // 8 * 8)
        row_blk = min(rows_fit, _round_up(R, 8))
        if R > 8:
            # >=2 row steps so v7x can shard the 'parallel' axis over both TCs.
            row_blk = min(row_blk, max(8, _round_up(pl.cdiv(R, 2), 8)))
    else:
        # Huge spatial extent: chunk H*W (128-aligned) and accumulate in VMEM.
        row_blk = 8
        hw_blk = max(128, (TILE_CHUNK // (8 * itemsize)) // 128 * 128)
        hw_blk = min(hw_blk, _round_up(HW, 128))
    n_r = pl.cdiv(R, row_blk)
    n_hw = pl.cdiv(HW, hw_blk)

    pool_kernel = functools.partial(_pool_kernel, hw=HW, hw_blk=hw_blk)
    pooled_max, pooled_avg = pl.pallas_call(
        pool_kernel,
        out_shape=(jax.ShapeDtypeStruct((R, 1), jnp.float32),
                   jax.ShapeDtypeStruct((R, 1), jnp.float32)),
        grid_spec=pltpu.PrefetchScalarGridSpec(
            num_scalar_prefetch=0,
            grid=(n_r, n_hw),
            in_specs=[pl.BlockSpec((row_blk, hw_blk), lambda i, k: (i, k))],
            out_specs=[pl.BlockSpec((row_blk, 1), lambda i, k: (i, 0)),
                       pl.BlockSpec((row_blk, 1), lambda i, k: (i, 0))]),
        compiler_params=pltpu.CompilerParams(
            dimension_semantics=("parallel", "arbitrary"),
            vmem_limit_bytes=40 * 1024 * 1024),
    )(x2)

    x_max = pooled_max[:, 0].reshape(B, C)
    x_avg = pooled_avg[:, 0].reshape(B, C)

    # ---- Stage 2: shared MLP + sigmoid (stacked -> 2 MXU matmuls total) -----
    Bp = _round_up(B, 8)
    Cp = _round_up(C, 128)
    C_p = _round_up(C_, 128)

    w1t = jnp.transpose(w1.reshape(C_, C)).astype(jnp.float32)   # (C, C_)
    w2t = jnp.transpose(w2.reshape(C, C_)).astype(jnp.float32)   # (C_, C)

    xs = (jnp.zeros((2 * Bp, Cp), jnp.float32)
          .at[:B, :C].set(x_max)
          .at[Bp:Bp + B, :C].set(x_avg))
    w1p = jnp.zeros((Cp, C_p), jnp.float32).at[:C, :C_].set(w1t)
    w2p = jnp.zeros((C_p, Cp), jnp.float32).at[:C_, :C].set(w2t)

    att = pl.pallas_call(
        functools.partial(_mlp_kernel, bp=Bp),
        out_shape=jax.ShapeDtypeStruct((Bp, Cp), jnp.float32),
    )(xs, w1p, w2p)

    return att[:B, :C].reshape(B, C, 1, 1).astype(x.dtype)


def lcam_ref(x, w1, w2):
    """Pure-JAX reference mirroring the PyTorch forward."""
    B, C, H, W = x.shape
    C_ = w1.shape[0]
    xf = x.astype(jnp.float32)
    x_max = jnp.max(xf, axis=(2, 3))
    x_avg = jnp.mean(xf, axis=(2, 3))
    W1 = w1.reshape(C_, C).astype(jnp.float32)
    W2 = w2.reshape(C, C_).astype(jnp.float32)

    def mlp(v):
        h = jnp.maximum(v @ W1.T, 0.0)
        return h @ W2.T

    att = jax.nn.sigmoid(mlp(x_max) + mlp(x_avg))
    return att.reshape(B, C, 1, 1).astype(x.dtype)


if __name__ == "__main__":
    key = jax.random.PRNGKey(0)
    kx, k1, k2 = jax.random.split(key, 3)
    B, C, H, W = 2, 4, 16, 16
    r = 16
    C_ = max(C // r, 1)

    x = jax.random.normal(kx, (B, C, H, W), dtype=jnp.float32)
    w1 = 0.1 * jax.random.normal(k1, (C_, C, 1, 1), dtype=jnp.float32)
    w2 = 0.1 * jax.random.normal(k2, (C, C_, 1, 1), dtype=jnp.float32)

    out = jax.block_until_ready(lcam(x, w1, w2))
    ref = lcam_ref(x, w1, w2)

    assert out.shape == (B, C, 1, 1) and out.dtype == x.dtype
    # Tolerance covers possible MXU f32 pass-decomposition vs XLA default-precision
    # matmul differences; any structural bug produces errors orders of magnitude larger.
    assert jnp.allclose(out, ref, atol=2e-3, rtol=2e-3), "mismatch vs reference"
    print("KERNEL_OK")
</pallas_src>

<mosaic_0001>
module attributes {stable_mosaic.version = 11 : i64} {
  func.func @_pool_kernel(%arg0: i32, %arg1: i32, %arg2: memref<8x256xf32, #tpu.memory_space<vmem>>, %arg3: memref<8x1xf32, #tpu.memory_space<vmem>>, %arg4: memref<8x1xf32, #tpu.memory_space<vmem>>) attributes {dimension_semantics = [#tpu.dimension_semantics<parallel>, #tpu.dimension_semantics<arbitrary>], iteration_bounds = array<i64: 1, 1>, scalar_prefetch = 0 : i64, scratch_operands = 0 : i64, tpu.core_type = #tpu.core_type<tc>, window_params = [{transform_indices = @transform_0, window_bounds = array<i64: 8, 256>}, {transform_indices = @transform_1, window_bounds = array<i64: 8, 1>}, {transform_indices = @transform_2, window_bounds = array<i64: 8, 1>}]} {
    %c0_i32 = arith.constant 0 : i32
    %0 = arith.cmpi eq, %arg1, %c0_i32 : i32
    %1 = arith.extui %0 : i1 to i32
    %c0_i32_0 = arith.constant 0 : i32
    %2 = arith.cmpi ne, %1, %c0_i32_0 : i32
    scf.if %2 {
      %cst_13 = arith.constant 0xFF800000 : f32
      %17 = vector.broadcast %cst_13 : f32 to vector<8x1xf32>
      %c0_14 = arith.constant 0 : index
      %c0_15 = arith.constant 0 : index
      %18 = vector.load %arg3[%c0_14, %c0_15] : memref<8x1xf32, #tpu.memory_space<vmem>>, vector<8x1xf32>
      tpu.vector_store %arg3[%c0_14, %c0_15], %17 {strides = array<i32>} : memref<8x1xf32, #tpu.memory_space<vmem>>, vector<8x1xf32>,
      %cst_16 = arith.constant 0.000000e+00 : f32
      %19 = vector.broadcast %cst_16 : f32 to vector<8x1xf32>
      %c0_17 = arith.constant 0 : index
      %c0_18 = arith.constant 0 : index
      %20 = vector.load %arg4[%c0_17, %c0_18] : memref<8x1xf32, #tpu.memory_space<vmem>>, vector<8x1xf32>
      tpu.vector_store %arg4[%c0_17, %c0_18], %19 {strides = array<i32>} : memref<8x1xf32, #tpu.memory_space<vmem>>, vector<8x1xf32>,
    } else {
    }
    %c0 = arith.constant 0 : index
    %c0_1 = arith.constant 0 : index
    %3 = vector.load %arg2[%c0, %c0_1] : memref<8x256xf32, #tpu.memory_space<vmem>>, vector<8x256xf32>
    %c0_2 = arith.constant 0 : index
    %c0_3 = arith.constant 0 : index
    %4 = vector.load %arg3[%c0_2, %c0_3] : memref<8x1xf32, #tpu.memory_space<vmem>>, vector<8x1xf32>
    %cst = arith.constant dense<0xFF800000> : vector<8xf32>
    %5 = vector.multi_reduction <maximumf>, %3, %cst [1] : vector<8x256xf32> to vector<8xf32>
    %6 = vector.shape_cast %5 : vector<8xf32> to vector<8x1xf32>
    %7 = arith.maximumf %4, %6 : vector<8x1xf32>
    %c0_4 = arith.constant 0 : index
    %c0_5 = arith.constant 0 : index
    %8 = vector.load %arg3[%c0_4, %c0_5] : memref<8x1xf32, #tpu.memory_space<vmem>>, vector<8x1xf32>
    tpu.vector_store %arg3[%c0_4, %c0_5], %7 {strides = array<i32>} : memref<8x1xf32, #tpu.memory_space<vmem>>, vector<8x1xf32>,
    %c0_6 = arith.constant 0 : index
    %c0_7 = arith.constant 0 : index
    %9 = vector.load %arg4[%c0_6, %c0_7] : memref<8x1xf32, #tpu.memory_space<vmem>>, vector<8x1xf32>
    %cst_8 = arith.constant dense<0.000000e+00> : vector<8xf32>
    %10 = vector.multi_reduction <add>, %3, %cst_8 [1] : vector<8x256xf32> to vector<8xf32>
    %11 = vector.shape_cast %10 : vector<8xf32> to vector<8x1xf32>
    %12 = arith.addf %9, %11 : vector<8x1xf32>
    %c0_9 = arith.constant 0 : index
    %c0_10 = arith.constant 0 : index
    %13 = vector.load %arg4[%c0_9, %c0_10] : memref<8x1xf32, #tpu.memory_space<vmem>>, vector<8x1xf32>
    tpu.vector_store %arg4[%c0_9, %c0_10], %12 {strides = array<i32>} : memref<8x1xf32, #tpu.memory_space<vmem>>, vector<8x1xf32>,
    %c0_i32_11 = arith.constant 0 : i32
    %14 = arith.cmpi eq, %arg1, %c0_i32_11 : i32
    %15 = arith.extui %14 : i1 to i32
    %c0_i32_12 = arith.constant 0 : i32
    %16 = arith.cmpi ne, %15, %c0_i32_12 : i32
    scf.if %16 {
      %c0_13 = arith.constant 0 : index
      %c0_14 = arith.constant 0 : index
      %17 = vector.load %arg4[%c0_13, %c0_14] : memref<8x1xf32, #tpu.memory_space<vmem>>, vector<8x1xf32>
      %cst_15 = arith.constant 3.906250e-03 : f32
      %18 = vector.broadcast %cst_15 : f32 to vector<8x1xf32>
      %19 = arith.mulf %17, %18 : vector<8x1xf32>
      %c0_16 = arith.constant 0 : index
      %c0_17 = arith.constant 0 : index
      %20 = vector.load %arg4[%c0_16, %c0_17] : memref<8x1xf32, #tpu.memory_space<vmem>>, vector<8x1xf32>
      tpu.vector_store %arg4[%c0_16, %c0_17], %19 {strides = array<i32>} : memref<8x1xf32, #tpu.memory_space<vmem>>, vector<8x1xf32>,
    } else {
    }
    return
  }
  func.func @transform_0(%arg0: i32, %arg1: i32) -> (i32, i32) {
    %c0_i32 = arith.constant 0 : i32
    return %arg0, %arg1 : i32, i32
  }
  func.func @transform_1(%arg0: i32, %arg1: i32) -> (i32, i32) {
    %c0_i32 = arith.constant 0 : i32
    %c0_i32_0 = arith.constant 0 : i32
    return %arg0, %c0_i32 : i32, i32
  }
  func.func @transform_2(%arg0: i32, %arg1: i32) -> (i32, i32) {
    %c0_i32 = arith.constant 0 : i32
    %c0_i32_0 = arith.constant 0 : i32
    return %arg0, %c0_i32 : i32, i32
  }
}

module attributes {stable_mosaic.version = 11 : i64} {
  func.func @_mlp_kernel(%arg0: memref<16x128xf32, #tpu.memory_space<vmem>>, %arg1: memref<128x128xf32, #tpu.memory_space<vmem>>, %arg2: memref<128x128xf32, #tpu.memory_space<vmem>>, %arg3: memref<8x128xf32, #tpu.memory_space<vmem>>) attributes {dimension_semantics = [], scalar_prefetch = 0 : i64, scratch_operands = 0 : i64, tpu.core_type = #tpu.core_type<tc>} {
    %c0 = arith.constant 0 : index
    %c0_0 = arith.constant 0 : index
    %0 = vector.load %arg0[%c0, %c0_0] : memref<16x128xf32, #tpu.memory_space<vmem>>, vector<16x128xf32>
    %c0_1 = arith.constant 0 : index
    %c0_2 = arith.constant 0 : index
    %1 = vector.load %arg1[%c0_1, %c0_2] : memref<128x128xf32, #tpu.memory_space<vmem>>, vector<128x128xf32>
    %cst = arith.constant dense<0.000000e+00> : vector<16x128xf32>
    %2 = tpu.matmul %0, %1, %cst {dimension_numbers = #tpu.dot_dimension_numbers<[1], [0], [0], [1], [0, 0, 1, 1], [], []>} : vector<16x128xf32>, vector<128x128xf32>, vector<16x128xf32> -> vector<16x128xf32>
    %cst_3 = arith.constant 0.000000e+00 : f32
    %3 = vector.broadcast %cst_3 : f32 to vector<16x128xf32>
    %4 = arith.maximumf %2, %3 : vector<16x128xf32>
    %c0_4 = arith.constant 0 : index
    %c0_5 = arith.constant 0 : index
    %5 = vector.load %arg2[%c0_4, %c0_5] : memref<128x128xf32, #tpu.memory_space<vmem>>, vector<128x128xf32>
    %cst_6 = arith.constant dense<0.000000e+00> : vector<16x128xf32>
    %6 = tpu.matmul %4, %5, %cst_6 {dimension_numbers = #tpu.dot_dimension_numbers<[1], [0], [0], [1], [0, 0, 1, 1], [], []>} : vector<16x128xf32>, vector<128x128xf32>, vector<16x128xf32> -> vector<16x128xf32>
    %7 = vector.extract_strided_slice %6 {offsets = [0, 0], sizes = [8, 128], strides = [1, 1]} : vector<16x128xf32> to vector<8x128xf32>
    %8 = vector.extract_strided_slice %6 {offsets = [8, 0], sizes = [8, 128], strides = [1, 1]} : vector<16x128xf32> to vector<8x128xf32>
    %9 = arith.addf %7, %8 : vector<8x128xf32>
    %10 = arith.negf %9 : vector<8x128xf32>
    %11 = math.exp %10 : vector<8x128xf32>
    %cst_7 = arith.constant 1.000000e+00 : f32
    %12 = vector.broadcast %cst_7 : f32 to vector<8x128xf32>
    %13 = arith.addf %12, %11 : vector<8x128xf32>
    %14 = arith.divf %12, %13 : vector<8x128xf32>
    %c0_8 = arith.constant 0 : index
    %c0_9 = arith.constant 0 : index
    %15 = vector.load %arg3[%c0_8, %c0_9] : memref<8x128xf32, #tpu.memory_space<vmem>>, vector<8x128xf32>
    tpu.vector_store %arg3[%c0_8, %c0_9], %14 {strides = array<i32>} : memref<8x128xf32, #tpu.memory_space<vmem>>, vector<8x128xf32>,
    return
  }
}

</mosaic_0001>

<llo_original>
// kernel: lcam.2
$region0: #{lcam.2}
  #allocation0 [shape = 'u32[]', space=smem, size = 0x4, offset = 0x4, fixed_abs, tag = 'smem constant byte address 0x4 - core index']
  #allocation1 [shape = 'u32[144,128]{1,0:T(1,128)}', space=vmem, size = 0x12000, scoped, tag = 'internal scratch']
  %s0 = inlined_call_operand.vmem [shape: f32[8,256], index: 0, kind: input, shape index: {}]
  %s1 = inlined_call_operand.vmem [shape: f32[8,1], index: 1, kind: output, shape index: {0}]
  %s2 = inlined_call_operand.vmem [shape: f32[8,1], index: 2, kind: output, shape index: {1}]
  %3 = xla_tuple %s1, %s2
  %s4 = sld [smem:[#allocation0]]
  $region30: #{lcam.2} parent=0
    _
  %s6 = ssub.s32 1, %s4
  %s7 = scalar_select 0, %s6, %s4
  // Predicated region
  $region2: #{lcam.2} parent=0 // pred_check
    _
  $region3: #{lcam.2} parent=0 // pred_check_branch
    %9 = sbr.rel (0) target = $region5
  $region4: #{lcam.2} parent=0 // pred_region
    _
  $region5: #{lcam.2} parent=0 // pred_fallthru
    _
  %p10 = scmp.eq.s32.totalorder 0, 0
  // Predicated region
  $region6: #{lcam.2} parent=0 // pred_check
    %p11 = pneg %p10
  $region7: #{lcam.2} parent=0 // pred_check_branch
    %13 = sbr.rel (%p11) target = $region9
  $region8: #{lcam.2} parent=0 // pred_region
    %vm14 = vcmask 7168
    %15 = vst.msk [vmem:[%s1] sm:$0xff] %vm14, -inf
    %16 = vst.msk [vmem:[%s2] sm:$0xff] %vm14, 0.0
  $region9: #{lcam.2} parent=0 // pred_fallthru
    _
  %v17 = vld [vmem:[%s0] sm:$0xff]
  %v18 = vld [vmem:[%s0 + $0x8] sm:$0xff]
  %v19 = vld [vmem:[%s1] sm:$0xff]
  %v20 = vmax.f32 %v17, %v18
  %21 = vmax.xlane.f32.xlu0 %v20
  %v22 = vpop.xlane.xlu0 %21
  %v23 = vmax.f32 %v19, %v22
  %vm24 = vcmask 7168
  %25 = vst.msk [vmem:[%s1] sm:$0xff] %vm24, %v23
  %v26 = vld [vmem:[%s2] sm:$0xff]
  %v27 = vadd.f32 %v17, %v18
  %28 = vadd.xlane.f32.xlu0 %v27
  %v29 = vpop.xlane.xlu0 %28
  %v30 = vadd.f32 %v26, %v29
  %31 = vst.msk [vmem:[%s2] sm:$0xff] %vm24, %v30
  // Predicated region
  $region10: #{lcam.2} parent=0 // pred_check
    %p32 = pneg %p10
  $region11: #{lcam.2} parent=0 // pred_check_branch
    %34 = sbr.rel (%p32) target = $region13
  $region12: #{lcam.2} parent=0 // pred_region
    %v35 = vld [vmem:[%s2] sm:$0xff]
    %v36 = vmul.f32 %v35, 0.00390625
    %37 = vst.msk [vmem:[%s2] sm:$0xff] %vm24, %v36
  $region13: #{lcam.2} parent=0 // pred_fallthru
    _
  // Predicated region
  $region14: #{lcam.2} parent=0 // pred_check
    _
  $region15: #{lcam.2} parent=0 // pred_check_branch
    %39 = sbr.rel (0) target = $region17
  $region16: #{lcam.2} parent=0 // pred_region
    _
  $region17: #{lcam.2} parent=0 // pred_fallthru
    _
  // Predicated region
  $region18: #{lcam.2} parent=0 // pred_check
    _
  $region19: #{lcam.2} parent=0 // pred_check_branch
    %41 = sbr.rel (0) target = $region21
  $region20: #{lcam.2} parent=0 // pred_region
    _
  $region21: #{lcam.2} parent=0 // pred_fallthru
    _
  // Predicated region
  $region22: #{lcam.2} parent=0 // pred_check
    _
  $region23: #{lcam.2} parent=0 // pred_check_branch
    %43 = sbr.rel (0) target = $region25
  $region24: #{lcam.2} parent=0 // pred_region
    _
  $region25: #{lcam.2} parent=0 // pred_fallthru
    _
  // Predicated region
  $region26: #{lcam.2} parent=0 // pred_check
    _
  $region27: #{lcam.2} parent=0 // pred_check_branch
    %45 = sbr.rel (0) target = $region29
  $region28: #{lcam.2} parent=0 // pred_region
    _
  $region29: #{lcam.2} parent=0 // pred_fallthru
    _

// kernel: lcam.3
$region0: #{lcam.3}
  #allocation0 [shape = 'u32[]', space=smem, size = 0x4, offset = 0x4, fixed_abs, tag = 'smem constant byte address 0x4 - core index']
  #allocation1 [shape = 'u32[144,128]{1,0:T(1,128)}', space=vmem, size = 0x12000, scoped, tag = 'internal scratch']
  %s0 = inlined_call_operand.vmem [shape: f32[16,128], index: 0, kind: input, shape index: {}]
  %s1 = inlined_call_operand.vmem [shape: f32[128,128], index: 1, kind: input, shape index: {}]
  %s2 = inlined_call_operand.vmem [shape: f32[128,128], index: 2, kind: input, shape index: {}]
  %s3 = inlined_call_operand.vmem [shape: f32[8,128], index: 3, kind: output, shape index: {}]
  %s4 = sld [smem:[#allocation0]]
  $region22: #{lcam.3} parent=0
    _
  %s6 = ssub.s32 1, %s4
  %s7 = scalar_select 0, %s6, %s4
  // Predicated region
  $region2: #{lcam.3} parent=0 // pred_check
    _
  $region3: #{lcam.3} parent=0 // pred_check_branch
    %9 = sbr.rel (0) target = $region5
  $region4: #{lcam.3} parent=0 // pred_region
    _
  $region5: #{lcam.3} parent=0 // pred_fallthru
    _
  // Predicated region
  $region6: #{lcam.3} parent=0 // pred_check
    _
  $region7: #{lcam.3} parent=0 // pred_check_branch
    %11 = sbr.rel (0) target = $region9
  $region8: #{lcam.3} parent=0 // pred_region
    _
  $region9: #{lcam.3} parent=0 // pred_fallthru
    _
  // Predicated region
  $region10: #{lcam.3} parent=0 // pred_check
    _
  $region11: #{lcam.3} parent=0 // pred_check_branch
    %13 = sbr.rel (0) target = $region13
  $region12: #{lcam.3} parent=0 // pred_region
    _
  $region13: #{lcam.3} parent=0 // pred_fallthru
    _
  %v14 = vld [vmem:[%s0] sm:$0xff]
  %v15 = vld [vmem:[%s0 + $0x8] sm:$0xff]
  %v16 = vld [vmem:[%s1] sm:$0xff]
  %v17 = vld [vmem:[%s1 + $0x8] sm:$0xff]
  %v18 = vld [vmem:[%s1 + $0x10] sm:$0xff]
  %v19 = vld [vmem:[%s1 + $0x18] sm:$0xff]
  %v20 = vld [vmem:[%s1 + $0x20] sm:$0xff]
  %v21 = vld [vmem:[%s1 + $0x28] sm:$0xff]
  %v22 = vld [vmem:[%s1 + $0x30] sm:$0xff]
  %v23 = vld [vmem:[%s1 + $0x38] sm:$0xff]
  %v24 = vld [vmem:[%s1 + $0x40] sm:$0xff]
  %v25 = vld [vmem:[%s1 + $0x48] sm:$0xff]
  %v26 = vld [vmem:[%s1 + $0x50] sm:$0xff]
  %v27 = vld [vmem:[%s1 + $0x58] sm:$0xff]
  %v28 = vld [vmem:[%s1 + $0x60] sm:$0xff]
  %v29 = vld [vmem:[%s1 + $0x68] sm:$0xff]
  %v30 = vld [vmem:[%s1 + $0x70] sm:$0xff]
  %v31 = vld [vmem:[%s1 + $0x78] sm:$0xff]
  %32 = vmatprep.subr.mxu0 0.0
  %33 = vmatpush1.msra.mxu0 %v16
  %34 = vmatprep.subr.mxu0 0.0
  %35 = vmatpush1.msra.mxu0 %v17
  %36 = vmatprep.subr.mxu0 0.0
  %37 = vmatpush1.msra.mxu0 %v18
  %38 = vmatprep.subr.mxu0 0.0
  %39 = vmatpush1.msra.mxu0 %v19
  %40 = vmatprep.subr.mxu0 0.0
  %41 = vmatpush1.msra.mxu0 %v20
  %42 = vmatprep.subr.mxu0 0.0
  %43 = vmatpush1.msra.mxu0 %v21
  %44 = vmatprep.subr.mxu0 0.0
  %45 = vmatpush1.msra.mxu0 %v22
  %46 = vmatprep.subr.mxu0 0.0
  %47 = vmatpush1.msra.mxu0 %v23
  %48 = vmatprep.subr.mxu0 0.0
  %49 = vmatpush1.msra.mxu0 %v24
  %50 = vmatprep.subr.mxu0 0.0
  %51 = vmatpush1.msra.mxu0 %v25
  %52 = vmatprep.subr.mxu0 0.0
  %53 = vmatpush1.msra.mxu0 %v26
  %54 = vmatprep.subr.mxu0 0.0
  %55 = vmatpush1.msra.mxu0 %v27
  %56 = vmatprep.subr.mxu0 0.0
  %57 = vmatpush1.msra.mxu0 %v28
  %58 = vmatprep.subr.mxu0 0.0
  %59 = vmatpush1.msra.mxu0 %v29
  %60 = vmatprep.subr.mxu0 0.0
  %61 = vmatpush1.msra.mxu0 %v30
  %62 = vmatprep.subr.mxu0 0.0
  %63 = vmatpush1.msra.mxu0 %v31
  %64 = vmatprep.subr.mxu0 0.0
  %65 = vmatpush1.msra.mxu0 0.0
  %66 = vmatprep.subr.mxu0 0.0
  %67 = vmatpush1.msra.mxu0 0.0
  %68 = vmatprep.subr.mxu0 0.0
  %69 = vmatpush1.msra.mxu0 0.0
  %70 = vmatprep.subr.mxu0 0.0
  %71 = vmatpush1.msra.mxu0 0.0
  %72 = vmatprep.subr.mxu0 0.0
  %73 = vmatpush1.msra.mxu0 0.0
  %74 = vmatprep.subr.mxu0 0.0
  %75 = vmatpush1.msra.mxu0 0.0
  %76 = vmatprep.subr.mxu0 0.0
  %77 = vmatpush1.msra.mxu0 0.0
  %78 = vmatprep.subr.mxu0 0.0
  %79 = vmatpush1.msra.mxu0 0.0
  %80 = vmatprep.subr.mxu0 0.0
  %81 = vmatpush1.msra.mxu0 0.0
  %82 = vmatprep.subr.mxu0 0.0
  %83 = vmatpush1.msra.mxu0 0.0
  %84 = vmatprep.subr.mxu0 0.0
  %85 = vmatpush1.msra.mxu0 0.0
  %86 = vmatprep.subr.mxu0 0.0
  %87 = vmatpush1.msra.mxu0 0.0
  %88 = vmatprep.subr.mxu0 0.0
  %89 = vmatpush1.msra.mxu0 0.0
  %90 = vmatprep.subr.mxu0 0.0
  %91 = vmatpush1.msra.mxu0 0.0
  %92 = vmatprep.subr.mxu0 0.0
  %93 = vmatpush1.msra.mxu0 0.0
  %94 = vmatprep.subr.mxu0 0.0
  %95 = vmatpush1.msra.mxu0 0.0
  %96 = vmatprep.mubr.f32.mxu0 0.0
  %97 = vmatmul.mubr.f32.gmra.mrb[0].mxu0 %v14
  %v98 = vpop.f32.mrb[0].mxu0
  %v99 = vadd.f32 0.0, %v98
  %v100 = vpop.f32.mrb[0].mxu0
  %101 = vmatprep.mubr.f32.mxu0 0.0
  %102 = vmatmul.mubr.f32.gmra.mrb[0].mxu0 %v15
  %v103 = vpop.f32.mrb[0].mxu0
  %v104 = vadd.f32 0.0, %v103
  %v105 = vpop.f32.mrb[0].mxu0
  %106 = vdwg.mxu0
  %v107 = vmax.f32 %v99, 0.0
  %v108 = vmax.f32 %v104, 0.0
  %v109 = vld [vmem:[%s2] sm:$0xff]
  %v110 = vld [vmem:[%s2 + $0x8] sm:$0xff]
  %v111 = vld [vmem:[%s2 + $0x10] sm:$0xff]
  %v112 = vld [vmem:[%s2 + $0x18] sm:$0xff]
  %v113 = vld [vmem:[%s2 + $0x20] sm:$0xff]
  %v114 = vld [vmem:[%s2 + $0x28] sm:$0xff]
  %v115 = vld [vmem:[%s2 + $0x30] sm:$0xff]
  %v116 = vld [vmem:[%s2 + $0x38] sm:$0xff]
  %v117 = vld [vmem:[%s2 + $0x40] sm:$0xff]
  %v118 = vld [vmem:[%s2 + $0x48] sm:$0xff]
  %v119 = vld [vmem:[%s2 + $0x50] sm:$0xff]
  %v120 = vld [vmem:[%s2 + $0x58] sm:$0xff]
  %v121 = vld [vmem:[%s2 + $0x60] sm:$0xff]
  %v122 = vld [vmem:[%s2 + $0x68] sm:$0xff]
  %v123 = vld [vmem:[%s2 + $0x70] sm:$0xff]
  %v124 = vld [vmem:[%s2 + $0x78] sm:$0xff]
  %125 = vmatprep.subr.mxu0 0.0
  %126 = vmatpush1.msra.mxu0 %v109
  %127 = vmatprep.subr.mxu0 0.0
  %128 = vmatpush1.msra.mxu0 %v110
  %129 = vmatprep.subr.mxu0 0.0
  %130 = vmatpush1.msra.mxu0 %v111
  %131 = vmatprep.subr.mxu0 0.0
  %132 = vmatpush1.msra.mxu0 %v112
  %133 = vmatprep.subr.mxu0 0.0
  %134 = vmatpush1.msra.mxu0 %v113
  %135 = vmatprep.subr.mxu0 0.0
  %136 = vmatpush1.msra.mxu0 %v114
  %137 = vmatprep.subr.mxu0 0.0
  %138 = vmatpush1.msra.mxu0 %v115
  %139 = vmatprep.subr.mxu0 0.0
  %140 = vmatpush1.msra.mxu0 %v116
  %141 = vmatprep.subr.mxu0 0.0
  %142 = vmatpush1.msra.mxu0 %v117
  %143 = vmatprep.subr.mxu0 0.0
  %144 = vmatpush1.msra.mxu0 %v118
  %145 = vmatprep.subr.mxu0 0.0
  %146 = vmatpush1.msra.mxu0 %v119
  %147 = vmatprep.subr.mxu0 0.0
  %148 = vmatpush1.msra.mxu0 %v120
  %149 = vmatprep.subr.mxu0 0.0
  %150 = vmatpush1.msra.mxu0 %v121
  %151 = vmatprep.subr.mxu0 0.0
  %152 = vmatpush1.msra.mxu0 %v122
  %153 = vmatprep.subr.mxu0 0.0
  %154 = vmatpush1.msra.mxu0 %v123
  %155 = vmatprep.subr.mxu0 0.0
  %156 = vmatpush1.msra.mxu0 %v124
  %157 = vmatprep.subr.mxu0 0.0
  %158 = vmatpush1.msra.mxu0 0.0
  %159 = vmatprep.subr.mxu0 0.0
  %160 = vmatpush1.msra.mxu0 0.0
  %161 = vmatprep.subr.mxu0 0.0
  %162 = vmatpush1.msra.mxu0 0.0
  %163 = vmatprep.subr.mxu0 0.0
  %164 = vmatpush1.msra.mxu0 0.0
  %165 = vmatprep.subr.mxu0 0.0
  %166 = vmatpush1.msra.mxu0 0.0
  %167 = vmatprep.subr.mxu0 0.0
  %168 = vmatpush1.msra.mxu0 0.0
  %169 = vmatprep.subr.mxu0 0.0
  %170 = vmatpush1.msra.mxu0 0.0
  %171 = vmatprep.subr.mxu0 0.0
  %172 = vmatpush1.msra.mxu0 0.0
  %173 = vmatprep.subr.mxu0 0.0
  %174 = vmatpush1.msra.mxu0 0.0
  %175 = vmatprep.subr.mxu0 0.0
  %176 = vmatpush1.msra.mxu0 0.0
  %177 = vmatprep.subr.mxu0 0.0
  %178 = vmatpush1.msra.mxu0 0.0
  %179 = vmatprep.subr.mxu0 0.0
  %180 = vmatpush1.msra.mxu0 0.0
  %181 = vmatprep.subr.mxu0 0.0
  %182 = vmatpush1.msra.mxu0 0.0
  %183 = vmatprep.subr.mxu0 0.0
  %184 = vmatpush1.msra.mxu0 0.0
  %185 = vmatprep.subr.mxu0 0.0
  %186 = vmatpush1.msra.mxu0 0.0
  %187 = vmatprep.subr.mxu0 0.0
  %188 = vmatpush1.msra.mxu0 0.0
  %189 = vmatprep.mubr.f32.mxu0 0.0
  %190 = vmatmul.mubr.f32.gmra.mrb[0].mxu0 %v107
  %v191 = vpop.f32.mrb[0].mxu0
  %v192 = vadd.f32 0.0, %v191
  %v193 = vpop.f32.mrb[0].mxu0
  %194 = vmatprep.mubr.f32.mxu0 0.0
  %195 = vmatmul.mubr.f32.gmra.mrb[0].mxu0 %v108
  %v196 = vpop.f32.mrb[0].mxu0
  %v197 = vadd.f32 0.0, %v196
  %v198 = vpop.f32.mrb[0].mxu0
  %199 = vdwg.mxu0
  %v200 = vadd.f32 %v192, %v197
  %v201 = vxor.u32 %v200, 2147483648
  %v202 = vmul.f32 %v201, 1.442695
  %v203 = vpow.pop %v202
  %v204 = vadd.f32 %v203, 1.0
  %v205 = vrcp.pop %v204
  %v206 = vmul.f32 1.0, %v205
  %207 = vst [vmem:[%s3] sm:$0xff] %v206
  // Predicated region
  $region14: #{lcam.3} parent=0 // pred_check
    _
  $region15: #{lcam.3} parent=0 // pred_check_branch
    %209 = sbr.rel (0) target = $region17
  $region16: #{lcam.3} parent=0 // pred_region
    _
  $region17: #{lcam.3} parent=0 // pred_fallthru
    _
  // Predicated region
  $region18: #{lcam.3} parent=0 // pred_check
    _
  $region19: #{lcam.3} parent=0 // pred_check_branch
    %211 = sbr.rel (0) target = $region21
  $region20: #{lcam.3} parent=0 // pred_region
    _
  $region21: #{lcam.3} parent=0 // pred_fallthru
    _

</llo_original>
